<compile_context>
chip_gen: v7x
topology: tpu7x:2x2x1
jax: 0.10.0
libtpu: 0.0.40
codegen_flags: <defaults>
</compile_context>

<pallas_src>
import functools

import jax
import jax.numpy as jnp
from jax.experimental import pallas as pl
from jax.experimental.pallas import tpu as pltpu

EMBED_DIM = 8
NUM_HEADS = 8
HEAD_DIM = EMBED_DIM // NUM_HEADS  # == 1
assert HEAD_DIM == 1, "kernel is specialized for head_dim == 1 (embed_dim == num_heads)"


def mha_kernel(N, Lq, Lk, x1f_ref, x2f_ref, wqT_ref, wkvT_ref,
               bq_ref, bkv_ref, woT_ref, bo_ref, out_ref, attn_ref):
    E = EMBED_DIM
    H = NUM_HEADS

    # ---- Fused input projections (2 MXU matmuls total). wqT is pre-scaled
    # by 1/sqrt(head_dim); weights are pre-transposed so no in-kernel .T.
    q = jnp.dot(x1f_ref[...], wqT_ref[...],
                preferred_element_type=jnp.float32) + bq_ref[...]       # (N*Lq, E)
    kv = jnp.dot(x2f_ref[...], wkvT_ref[...],
                 preferred_element_type=jnp.float32) + bkv_ref[...]     # (N*Lk, 2E)
    k = kv[:, :E]                                                       # (N*Lk, E)
    v = kv[:, E:]                                                       # (N*Lk, E)

    # ---- head_dim == 1: per-head score is a rank-1 outer product, done as a
    # single VPU broadcast over all batches & heads (no MXU, no unrolled loops).
    q4 = q.reshape(N, Lq, 1, H)
    k4 = k.reshape(N, 1, Lk, H)
    v4 = v.reshape(N, 1, Lk, H)
    s = q4 * k4                                   # (N, Lq, Lk, H)

    # ---- Softmax over the key axis (axis=2); divide goes to the EUP.
    m = jnp.max(s, axis=2, keepdims=True)
    e = jnp.exp(s - m)
    denom = jnp.sum(e, axis=2, keepdims=True)
    p = e * pl.reciprocal(denom, approx=True)     # (N, Lq, Lk, H)

    # ---- Per-head context: sum over keys (VPU multiply + XLU reduce).
    ctx = jnp.sum(p * v4, axis=2)                 # (N, Lq, H) == (N, Lq, E)

    # ---- Single fused output projection for all batches/heads, one store.
    out = jnp.dot(ctx.reshape(N * Lq, E), woT_ref[...],
                  preferred_element_type=jnp.float32) + bo_ref[...]
    out_ref[...] = out                            # (N*Lq, E) contiguous slab

    # ---- Head-averaged attention weights, one store.
    attn_ref[...] = jnp.mean(p, axis=-1)          # (N, Lq, Lk)


def _vmem_spec():
    # No grid: whole array resident in VMEM, no blocking / index_map needed.
    return pl.BlockSpec(memory_space=pltpu.MemorySpace.VMEM)


def prepare_params(in_proj_w, in_proj_b, out_w, out_b):
    """One-time constant folding of nn.MultiheadAttention parameters:
       * split in_proj into Q and fused K|V parts,
       * fold 1/sqrt(head_dim) into the Q weight and bias,
       * pre-transpose all weights so the kernel never transposes."""
    E = EMBED_DIM
    scale = 1.0 / (HEAD_DIM ** 0.5)
    wqT = (in_proj_w[:E] * scale).T               # (E, E)
    wkvT = in_proj_w[E:].T                        # (E, 2E)  = [Wk; Wv]^T
    bq = (in_proj_b[:E] * scale).reshape(1, E)
    bkv = in_proj_b[E:].reshape(1, 2 * E)
    woT = out_w.T                                 # (E, E)
    bo = out_b.reshape(1, E)
    return (wqT, wkvT, bq, bkv, woT, bo)


@jax.jit
def multihead_attention(x1, x2, params):
    """query = x1 (Lq, N, E);  key = value = x2 (Lk, N, E).
    Returns (attn_output (Lq, N, E), attn_weights (N, Lq, Lk))."""
    wqT, wkvT, bq, bkv, woT, bo = params
    Lq, N, E = x1.shape
    Lk = x2.shape[0]

    # Layout plumbing outside the kernel: batch-major + flattened so kernel
    # loads/stores are contiguous 2-D slabs.
    x1f = x1.transpose(1, 0, 2).reshape(N * Lq, E)
    x2f = x2.transpose(1, 0, 2).reshape(N * Lk, E)

    kernel = functools.partial(mha_kernel, N, Lq, Lk)
    out_flat, attn = pl.pallas_call(
        kernel,
        out_shape=(jax.ShapeDtypeStruct((N * Lq, E), jnp.float32),
                   jax.ShapeDtypeStruct((N, Lq, Lk), jnp.float32)),
        in_specs=[_vmem_spec() for _ in range(8)],
        out_specs=(_vmem_spec(), _vmem_spec()),
    )(x1f, x2f, wqT, wkvT, bq, bkv, woT, bo)

    # Back to PyTorch's seq-first (Lq, N, E) layout.
    out = out_flat.reshape(N, Lq, E).transpose(1, 0, 2)
    return out, attn


def ref_mha(x1, x2, in_proj_w, in_proj_b, out_w, out_b):
    """Pure-JAX reference (mirrors torch.nn.MultiheadAttention forward)."""
    Lq, N, E = x1.shape
    Lk = x2.shape[0]
    H, hd = NUM_HEADS, HEAD_DIM
    wq, wk, wv = in_proj_w[:E], in_proj_w[E:2 * E], in_proj_w[2 * E:]
    bq, bk, bv = in_proj_b[:E], in_proj_b[E:2 * E], in_proj_b[2 * E:]
    q = jnp.einsum('lne,fe->lnf', x1, wq) + bq
    k = jnp.einsum('lne,fe->lnf', x2, wk) + bk
    v = jnp.einsum('lne,fe->lnf', x2, wv) + bv
    q = q * (1.0 / hd ** 0.5)
    qh = q.reshape(Lq, N, H, hd).transpose(1, 2, 0, 3)
    kh = k.reshape(Lk, N, H, hd).transpose(1, 2, 0, 3)
    vh = v.reshape(Lk, N, H, hd).transpose(1, 2, 0, 3)
    s = jnp.einsum('nhqd,nhkd->nhqk', qh, kh)
    p = jax.nn.softmax(s, axis=-1)
    ctx = jnp.einsum('nhqk,nhkd->nhqd', p, vh)
    ctx = ctx.transpose(2, 0, 1, 3).reshape(Lq, N, E)
    out = jnp.einsum('lne,fe->lnf', ctx, out_w) + out_b
    return out, p.mean(axis=1)


if __name__ == "__main__":
    key = jax.random.PRNGKey(0)
    ks = jax.random.split(key, 6)

    # Small shapes consistent with embed_dim=8 (the spec's example tensor
    # shapes (1,8,32)/(1,8,64) are inconsistent with embed_dim=8).
    Lq, Lk, N, E = 4, 6, 2, EMBED_DIM
    x1 = jax.random.normal(ks[0], (Lq, N, E), jnp.float32)
    x2 = jax.random.normal(ks[1], (Lk, N, E), jnp.float32)

    # Parameters mirroring MultiheadAttention shapes:
    #   in_proj_weight (3E, E), in_proj_bias (3E,), out_proj (E, E) + (E,).
    in_proj_w = jax.random.normal(ks[2], (3 * E, E), jnp.float32) * 0.3
    in_proj_b = jax.random.normal(ks[3], (3 * E,), jnp.float32) * 0.1
    out_w = jax.random.normal(ks[4], (E, E), jnp.float32) * 0.3
    out_b = jax.random.normal(ks[5], (E,), jnp.float32) * 0.1

    params = prepare_params(in_proj_w, in_proj_b, out_w, out_b)  # one-time fold

    out, attn = multihead_attention(x1, x2, params)
    jax.block_until_ready((out, attn))

    ref_out, ref_attn = ref_mha(x1, x2, in_proj_w, in_proj_b, out_w, out_b)
    assert out.shape == (Lq, N, E) and attn.shape == (N, Lq, Lk)
    # Tolerance relaxed slightly because softmax uses EUP approx reciprocal.
    assert jnp.allclose(out, ref_out, atol=2e-3, rtol=2e-3)
    assert jnp.allclose(attn, ref_attn, atol=2e-3, rtol=2e-3)
    print("KERNEL_OK")
</pallas_src>

<mosaic_0001>
module attributes {stable_mosaic.version = 11 : i64} {
  func.func @mha_kernel(%arg0: memref<8x8xf32, #tpu.memory_space<vmem>>, %arg1: memref<12x8xf32, #tpu.memory_space<vmem>>, %arg2: memref<8x8xf32, #tpu.memory_space<vmem>>, %arg3: memref<8x16xf32, #tpu.memory_space<vmem>>, %arg4: memref<1x8xf32, #tpu.memory_space<vmem>>, %arg5: memref<1x16xf32, #tpu.memory_space<vmem>>, %arg6: memref<8x8xf32, #tpu.memory_space<vmem>>, %arg7: memref<1x8xf32, #tpu.memory_space<vmem>>, %arg8: memref<8x8xf32, #tpu.memory_space<vmem>>, %arg9: memref<2x4x6xf32, #tpu.memory_space<vmem>>) attributes {dimension_semantics = [], scalar_prefetch = 0 : i64, scratch_operands = 0 : i64, tpu.core_type = #tpu.core_type<tc>} {
    %c0 = arith.constant 0 : index
    %c0_0 = arith.constant 0 : index
    %0 = vector.load %arg0[%c0, %c0_0] : memref<8x8xf32, #tpu.memory_space<vmem>>, vector<8x8xf32>
    %c0_1 = arith.constant 0 : index
    %c0_2 = arith.constant 0 : index
    %1 = vector.load %arg2[%c0_1, %c0_2] : memref<8x8xf32, #tpu.memory_space<vmem>>, vector<8x8xf32>
    %cst = arith.constant dense<0.000000e+00> : vector<8x8xf32>
    %2 = tpu.matmul %0, %1, %cst {dimension_numbers = #tpu.dot_dimension_numbers<[1], [0], [0], [1], [0, 0, 1, 1], [], []>} : vector<8x8xf32>, vector<8x8xf32>, vector<8x8xf32> -> vector<8x8xf32>
    %c0_3 = arith.constant 0 : index
    %c0_4 = arith.constant 0 : index
    %3 = vector.load %arg4[%c0_3, %c0_4] : memref<1x8xf32, #tpu.memory_space<vmem>>, vector<1x8xf32>
    %4 = vector.broadcast %3 : vector<1x8xf32> to vector<8x8xf32>
    %5 = arith.addf %2, %4 : vector<8x8xf32>
    %c0_5 = arith.constant 0 : index
    %c0_6 = arith.constant 0 : index
    %6 = vector.load %arg1[%c0_5, %c0_6] : memref<12x8xf32, #tpu.memory_space<vmem>>, vector<12x8xf32>
    %c0_7 = arith.constant 0 : index
    %c0_8 = arith.constant 0 : index
    %7 = vector.load %arg3[%c0_7, %c0_8] : memref<8x16xf32, #tpu.memory_space<vmem>>, vector<8x16xf32>
    %cst_9 = arith.constant dense<0.000000e+00> : vector<12x16xf32>
    %8 = tpu.matmul %6, %7, %cst_9 {dimension_numbers = #tpu.dot_dimension_numbers<[1], [0], [0], [1], [0, 0, 1, 1], [], []>} : vector<12x8xf32>, vector<8x16xf32>, vector<12x16xf32> -> vector<12x16xf32>
    %c0_10 = arith.constant 0 : index
    %c0_11 = arith.constant 0 : index
    %9 = vector.load %arg5[%c0_10, %c0_11] : memref<1x16xf32, #tpu.memory_space<vmem>>, vector<1x16xf32>
    %10 = vector.broadcast %9 : vector<1x16xf32> to vector<12x16xf32>
    %11 = arith.addf %8, %10 : vector<12x16xf32>
    %12 = vector.extract_strided_slice %11 {offsets = [0, 0], sizes = [12, 8], strides = [1, 1]} : vector<12x16xf32> to vector<12x8xf32>
    %13 = vector.extract_strided_slice %11 {offsets = [0, 8], sizes = [12, 8], strides = [1, 1]} : vector<12x16xf32> to vector<12x8xf32>
    %14 = vector.shape_cast %5 : vector<8x8xf32> to vector<2x4x1x8xf32>
    %15 = vector.shape_cast %12 : vector<12x8xf32> to vector<2x1x6x8xf32>
    %16 = vector.shape_cast %13 : vector<12x8xf32> to vector<2x1x6x8xf32>
    %17 = vector.broadcast %14 : vector<2x4x1x8xf32> to vector<2x4x6x8xf32>
    %18 = vector.broadcast %15 : vector<2x1x6x8xf32> to vector<2x4x6x8xf32>
    %19 = arith.mulf %17, %18 : vector<2x4x6x8xf32>
    %cst_12 = arith.constant dense<0xFF800000> : vector<2x4x8xf32>
    %20 = vector.multi_reduction <maximumf>, %19, %cst_12 [2] : vector<2x4x6x8xf32> to vector<2x4x8xf32>
    %21 = vector.shape_cast %20 : vector<2x4x8xf32> to vector<2x4x1x8xf32>
    %22 = vector.broadcast %21 : vector<2x4x1x8xf32> to vector<2x4x6x8xf32>
    %23 = arith.subf %19, %22 : vector<2x4x6x8xf32>
    %24 = math.exp %23 : vector<2x4x6x8xf32>
    %cst_13 = arith.constant dense<0.000000e+00> : vector<2x4x8xf32>
    %25 = vector.multi_reduction <add>, %24, %cst_13 [2] : vector<2x4x6x8xf32> to vector<2x4x8xf32>
    %26 = vector.shape_cast %25 : vector<2x4x8xf32> to vector<2x4x1x8xf32>
    %27 = tpu.reciprocal %26 {approx = true} : vector<2x4x1x8xf32> -> vector<2x4x1x8xf32>
    %28 = vector.broadcast %27 : vector<2x4x1x8xf32> to vector<2x4x6x8xf32>
    %29 = arith.mulf %24, %28 : vector<2x4x6x8xf32>
    %30 = vector.broadcast %16 : vector<2x1x6x8xf32> to vector<2x4x6x8xf32>
    %31 = arith.mulf %29, %30 : vector<2x4x6x8xf32>
    %cst_14 = arith.constant dense<0.000000e+00> : vector<2x4x8xf32>
    %32 = vector.multi_reduction <add>, %31, %cst_14 [2] : vector<2x4x6x8xf32> to vector<2x4x8xf32>
    %33 = vector.shape_cast %32 : vector<2x4x8xf32> to vector<8x8xf32>
    %c0_15 = arith.constant 0 : index
    %c0_16 = arith.constant 0 : index
    %34 = vector.load %arg6[%c0_15, %c0_16] : memref<8x8xf32, #tpu.memory_space<vmem>>, vector<8x8xf32>
    %cst_17 = arith.constant dense<0.000000e+00> : vector<8x8xf32>
    %35 = tpu.matmul %33, %34, %cst_17 {dimension_numbers = #tpu.dot_dimension_numbers<[1], [0], [0], [1], [0, 0, 1, 1], [], []>} : vector<8x8xf32>, vector<8x8xf32>, vector<8x8xf32> -> vector<8x8xf32>
    %c0_18 = arith.constant 0 : index
    %c0_19 = arith.constant 0 : index
    %36 = vector.load %arg7[%c0_18, %c0_19] : memref<1x8xf32, #tpu.memory_space<vmem>>, vector<1x8xf32>
    %37 = vector.broadcast %36 : vector<1x8xf32> to vector<8x8xf32>
    %38 = arith.addf %35, %37 : vector<8x8xf32>
    %c0_20 = arith.constant 0 : index
    %c0_21 = arith.constant 0 : index
    %39 = vector.load %arg8[%c0_20, %c0_21] : memref<8x8xf32, #tpu.memory_space<vmem>>, vector<8x8xf32>
    tpu.vector_store %arg8[%c0_20, %c0_21], %38 {strides = array<i32>} : memref<8x8xf32, #tpu.memory_space<vmem>>, vector<8x8xf32>,
    %cst_22 = arith.constant dense<0.000000e+00> : vector<2x4x6xf32>
    %40 = vector.multi_reduction <add>, %29, %cst_22 [3] : vector<2x4x6x8xf32> to vector<2x4x6xf32>
    %cst_23 = arith.constant 8.000000e+00 : f32
    %41 = vector.broadcast %cst_23 : f32 to vector<2x4x6xf32>
    %42 = arith.divf %40, %41 : vector<2x4x6xf32>
    %c0_24 = arith.constant 0 : index
    %c0_25 = arith.constant 0 : index
    %c0_26 = arith.constant 0 : index
    %43 = vector.load %arg9[%c0_24, %c0_25, %c0_26] : memref<2x4x6xf32, #tpu.memory_space<vmem>>, vector<2x4x6xf32>
    tpu.vector_store %arg9[%c0_24, %c0_25, %c0_26], %42 {strides = array<i32>} : memref<2x4x6xf32, #tpu.memory_space<vmem>>, vector<2x4x6xf32>,
    return
  }
}

</mosaic_0001>

<llo_original>
// kernel: multihead_attention.1
$region0: #{multihead_attention.1}
  #allocation0 [shape = 'u32[]', space=smem, size = 0x4, offset = 0x4, fixed_abs, tag = 'smem constant byte address 0x4 - core index']
  #allocation1 [shape = 'u32[144,128]{1,0:T(1,128)}', space=vmem, size = 0x12000, scoped, tag = 'internal scratch']
  %s0 = inlined_call_operand.vmem [shape: f32[8,8], index: 0, kind: input, shape index: {}]
  %s1 = inlined_call_operand.vmem [shape: f32[12,8], index: 1, kind: input, shape index: {}]
  %s2 = inlined_call_operand.vmem [shape: f32[8,8], index: 2, kind: input, shape index: {}]
  %s3 = inlined_call_operand.vmem [shape: f32[8,16], index: 3, kind: input, shape index: {}]
  %s4 = inlined_call_operand.vmem [shape: f32[1,8], index: 4, kind: input, shape index: {}]
  %s5 = inlined_call_operand.vmem [shape: f32[1,16], index: 5, kind: input, shape index: {}]
  %s6 = inlined_call_operand.vmem [shape: f32[8,8], index: 6, kind: input, shape index: {}]
  %s7 = inlined_call_operand.vmem [shape: f32[1,8], index: 7, kind: input, shape index: {}]
  %s8 = inlined_call_operand.vmem [shape: f32[8,8], index: 8, kind: output, shape index: {0}]
  %s9 = inlined_call_operand.hbm [shape: f32[2,4,6], index: 9, kind: output, shape index: {1}]
  %10 = xla_tuple %s8, %s9
  %s11 = sld [smem:[#allocation0]]
  $region50: #{multihead_attention.1} parent=0
    _
  %s13 = ssub.s32 1, %s11
  %s14 = scalar_select 0, %s13, %s11
  $region1: #{multihead_attention.1} parent=0
    #allocation2 [shape = 'u8[4096]{0}', space=vmem, size = 0x1000, scoped, tag = 'output window, operand 1, single buffered']
    #allocation3 [shape = 's32[1]{0}', space=sflag, size = 0x4, scoped, tag = 'scoped memory for multihead_attention.1']
    %15 = vsyncpa [#allocation3], 0
    // Predicated region
    $region2: #{multihead_attention.1} parent=1 // pred_check
      _
    $region3: #{multihead_attention.1} parent=1 // pred_check_branch
      %17 = sbr.rel (0) target = $region5
    $region4: #{multihead_attention.1} parent=1 // pred_region
      _
    $region5: #{multihead_attention.1} parent=1 // pred_fallthru
      _
    // Predicated region
    $region6: #{multihead_attention.1} parent=1 // pred_check
      _
    $region7: #{multihead_attention.1} parent=1 // pred_check_branch
      %19 = sbr.rel (0) target = $region9
    $region8: #{multihead_attention.1} parent=1 // pred_region
      _
    $region9: #{multihead_attention.1} parent=1 // pred_fallthru
      _
    // Predicated region
    $region10: #{multihead_attention.1} parent=1 // pred_check
      _
    $region11: #{multihead_attention.1} parent=1 // pred_check_branch
      %21 = sbr.rel (0) target = $region13
    $region12: #{multihead_attention.1} parent=1 // pred_region
      _
    $region13: #{multihead_attention.1} parent=1 // pred_fallthru
      _
    // Predicated region
    $region14: #{multihead_attention.1} parent=1 // pred_check
      _
    $region15: #{multihead_attention.1} parent=1 // pred_check_branch
      %23 = sbr.rel (0) target = $region17
    $region16: #{multihead_attention.1} parent=1 // pred_region
      _
    $region17: #{multihead_attention.1} parent=1 // pred_fallthru
      _
    // Predicated region
    $region18: #{multihead_attention.1} parent=1 // pred_check
      _
    $region19: #{multihead_attention.1} parent=1 // pred_check_branch
      %25 = sbr.rel (0) target = $region21
    $region20: #{multihead_attention.1} parent=1 // pred_region
      _
    $region21: #{multihead_attention.1} parent=1 // pred_fallthru
      _
    // Predicated region
    $region22: #{multihead_attention.1} parent=1 // pred_check
      _
    $region23: #{multihead_attention.1} parent=1 // pred_check_branch
      %27 = sbr.rel (0) target = $region25
    $region24: #{multihead_attention.1} parent=1 // pred_region
      _
    $region25: #{multihead_attention.1} parent=1 // pred_fallthru
      _
    // Predicated region
    $region26: #{multihead_attention.1} parent=1 // pred_check
      _
    $region27: #{multihead_attention.1} parent=1 // pred_check_branch
      %29 = sbr.rel (0) target = $region29
    $region28: #{multihead_attention.1} parent=1 // pred_region
      _
    $region29: #{multihead_attention.1} parent=1 // pred_fallthru
      _
    // Predicated region
    $region30: #{multihead_attention.1} parent=1 // pred_check
      _
    $region31: #{multihead_attention.1} parent=1 // pred_check_branch
      %31 = sbr.rel (0) target = $region33
    $region32: #{multihead_attention.1} parent=1 // pred_region
      _
    $region33: #{multihead_attention.1} parent=1 // pred_fallthru
      _
    %v32 = vld [vmem:[%s0] sm:$0xff]
    %v33 = vld [vmem:[%s2] sm:$0xff]
    %v34 = vld [vmem:[%s4] sm:$0x1]
    %v36 = vlaneseq
    %v37 = vshrl.u32 %v36, 7
    %v38 = vsub.s32 0, %v37
    %v39 = vrot.slane %v34, %v38
    %vm41 = vcmask 64512
    %v43 = vsel %vm41, %v32, 0
    %45 = vmatprep.subr.mxu0 0.0
    %46 = vmatpush1.msra.mxu0 %v33
    %47 = vmatprep.subr.mxu0 0.0
    %48 = vmatpush1.msra.mxu0 0.0
    %49 = vmatprep.subr.mxu0 0.0
    %50 = vmatpush1.msra.mxu0 0.0
    %51 = vmatprep.subr.mxu0 0.0
    %52 = vmatpush1.msra.mxu0 0.0
    %53 = vmatprep.subr.mxu0 0.0
    %54 = vmatpush1.msra.mxu0 0.0
    %55 = vmatprep.subr.mxu0 0.0
    %56 = vmatpush1.msra.mxu0 0.0
    %57 = vmatprep.subr.mxu0 0.0
    %58 = vmatpush1.msra.mxu0 0.0
    %59 = vmatprep.subr.mxu0 0.0
    %60 = vmatpush1.msra.mxu0 0.0
    %61 = vmatprep.subr.mxu0 0.0
    %62 = vmatpush1.msra.mxu0 0.0
    %63 = vmatprep.subr.mxu0 0.0
    %64 = vmatpush1.msra.mxu0 0.0
    %65 = vmatprep.subr.mxu0 0.0
    %66 = vmatpush1.msra.mxu0 0.0
    %67 = vmatprep.subr.mxu0 0.0
    %68 = vmatpush1.msra.mxu0 0.0
    %69 = vmatprep.subr.mxu0 0.0
    %70 = vmatpush1.msra.mxu0 0.0
    %71 = vmatprep.subr.mxu0 0.0
    %72 = vmatpush1.msra.mxu0 0.0
    %73 = vmatprep.subr.mxu0 0.0
    %74 = vmatpush1.msra.mxu0 0.0
    %75 = vmatprep.subr.mxu0 0.0
    %76 = vmatpush1.msra.mxu0 0.0
    %77 = vmatprep.subr.mxu0 0.0
    %78 = vmatpush1.msra.mxu0 0.0
    %79 = vmatprep.subr.mxu0 0.0
    %80 = vmatpush1.msra.mxu0 0.0
    %81 = vmatprep.subr.mxu0 0.0
    %82 = vmatpush1.msra.mxu0 0.0
    %83 = vmatprep.subr.mxu0 0.0
    %84 = vmatpush1.msra.mxu0 0.0
    %85 = vmatprep.subr.mxu0 0.0
    %86 = vmatpush1.msra.mxu0 0.0
    %87 = vmatprep.subr.mxu0 0.0
    %88 = vmatpush1.msra.mxu0 0.0
    %89 = vmatprep.subr.mxu0 0.0
    %90 = vmatpush1.msra.mxu0 0.0
    %91 = vmatprep.subr.mxu0 0.0
    %92 = vmatpush1.msra.mxu0 0.0
    %93 = vmatprep.subr.mxu0 0.0
    %94 = vmatpush1.msra.mxu0 0.0
    %95 = vmatprep.subr.mxu0 0.0
    %96 = vmatpush1.msra.mxu0 0.0
    %97 = vmatprep.subr.mxu0 0.0
    %98 = vmatpush1.msra.mxu0 0.0
    %99 = vmatprep.subr.mxu0 0.0
    %100 = vmatpush1.msra.mxu0 0.0
    %101 = vmatprep.subr.mxu0 0.0
    %102 = vmatpush1.msra.mxu0 0.0
    %103 = vmatprep.subr.mxu0 0.0
    %104 = vmatpush1.msra.mxu0 0.0
    %105 = vmatprep.subr.mxu0 0.0
    %106 = vmatpush1.msra.mxu0 0.0
    %107 = vmatprep.subr.mxu0 0.0
    %108 = vmatpush1.msra.mxu0 0.0
    %109 = vmatprep.mubr.f32.mxu0 0.0
    %110 = vmatmul.mubr.f32.gmra.mrb[0].mxu0 %v43
    %v111 = vpop.f32.mrb[0].mxu0
    %v112 = vadd.f32 %v39, %v111
    %v113 = vpop.f32.mrb[0].mxu0
    %114 = vdwg.mxu0
    %v115 = vld [vmem:[%s1] sm:$0xff]
    %v116 = vld [vmem:[%s1 + $0x8] sm:$0xf]
    %v117 = vld [vmem:[%s3] sm:$0xff]
    %v118 = vld [vmem:[%s5] sm:$0x1]
    %v120 = vlaneseq
    %v121 = vshrl.u32 %v120, 7
    %v122 = vsub.s32 0, %v121
    %v123 = vrot.slane %v118, %v122
    %v126 = vsel %vm41, %v115, 0
    %v129 = vsel %vm41, %v116, 0
    %131 = vmatprep.subr.mxu0 0.0
    %132 = vmatpush1.msra.mxu0 %v117
    %133 = vmatprep.subr.mxu0 0.0
    %134 = vmatpush1.msra.mxu0 0.0
    %135 = vmatprep.subr.mxu0 0.0
    %136 = vmatpush1.msra.mxu0 0.0
    %137 = vmatprep.subr.mxu0 0.0
    %138 = vmatpush1.msra.mxu0 0.0
    %139 = vmatprep.subr.mxu0 0.0
    %140 = vmatpush1.msra.mxu0 0.0
    %141 = vmatprep.subr.mxu0 0.0
    %142 = vmatpush1.msra.mxu0 0.0
    %143 = vmatprep.subr.mxu0 0.0
    %144 = vmatpush1.msra.mxu0 0.0
    %145 = vmatprep.subr.mxu0 0.0
    %146 = vmatpush1.msra.mxu0 0.0
    %147 = vmatprep.subr.mxu0 0.0
    %148 = vmatpush1.msra.mxu0 0.0
    %149 = vmatprep.subr.mxu0 0.0
    %150 = vmatpush1.msra.mxu0 0.0
    %151 = vmatprep.subr.mxu0 0.0
    %152 = vmatpush1.msra.mxu0 0.0
    %153 = vmatprep.subr.mxu0 0.0
    %154 = vmatpush1.msra.mxu0 0.0
    %155 = vmatprep.subr.mxu0 0.0
    %156 = vmatpush1.msra.mxu0 0.0
    %157 = vmatprep.subr.mxu0 0.0
    %158 = vmatpush1.msra.mxu0 0.0
    %159 = vmatprep.subr.mxu0 0.0
    %160 = vmatpush1.msra.mxu0 0.0
    %161 = vmatprep.subr.mxu0 0.0
    %162 = vmatpush1.msra.mxu0 0.0
    %163 = vmatprep.subr.mxu0 0.0
    %164 = vmatpush1.msra.mxu0 0.0
    %165 = vmatprep.subr.mxu0 0.0
    %166 = vmatpush1.msra.mxu0 0.0
    %167 = vmatprep.subr.mxu0 0.0
    %168 = vmatpush1.msra.mxu0 0.0
    %169 = vmatprep.subr.mxu0 0.0
    %170 = vmatpush1.msra.mxu0 0.0
    %171 = vmatprep.subr.mxu0 0.0
    %172 = vmatpush1.msra.mxu0 0.0
    %173 = vmatprep.subr.mxu0 0.0
    %174 = vmatpush1.msra.mxu0 0.0
    %175 = vmatprep.subr.mxu0 0.0
    %176 = vmatpush1.msra.mxu0 0.0
    %177 = vmatprep.subr.mxu0 0.0
    %178 = vmatpush1.msra.mxu0 0.0
    %179 = vmatprep.subr.mxu0 0.0
    %180 = vmatpush1.msra.mxu0 0.0
    %181 = vmatprep.subr.mxu0 0.0
    %182 = vmatpush1.msra.mxu0 0.0
    %183 = vmatprep.subr.mxu0 0.0
    %184 = vmatpush1.msra.mxu0 0.0
    %185 = vmatprep.subr.mxu0 0.0
    %186 = vmatpush1.msra.mxu0 0.0
    %187 = vmatprep.subr.mxu0 0.0
    %188 = vmatpush1.msra.mxu0 0.0
    %189 = vmatprep.subr.mxu0 0.0
    %190 = vmatpush1.msra.mxu0 0.0
    %191 = vmatprep.subr.mxu0 0.0
    %192 = vmatpush1.msra.mxu0 0.0
    %193 = vmatprep.subr.mxu0 0.0
    %194 = vmatpush1.msra.mxu0 0.0
    %195 = vmatprep.mubr.f32.mxu0 0.0
    %196 = vmatmul.mubr.f32.gmra.mrb[0].mxu0 %v126
    %v197 = vpop.f32.mrb[0].mxu0
    %v198 = vadd.f32 %v123, %v197
    %v199 = vpop.f32.mrb[0].mxu0
    %200 = vmatprep.mubr.f32.mxu0 0.0
    %201 = vmatmul.mubr.f32.gmra.mrb[0].mxu0 %v129
    %v202 = vpop.f32.mrb[0].mxu0
    %v203 = vadd.f32 %v123, %v202
    %v204 = vpop.f32.mrb[0].mxu0
    %205 = vdwg.mxu0
    %v207 = vcombine.high %v112, %v112
    %v209 = vunpack.c.l.s4 1966171168
    %v210 = vunpack.c.0.s8 %v209
    %v211 = vlaneseq
    %v212 = vshrl.u32 %v211, 7
    %v213 = vsub.s32 %v210, %v212
    %v214 = vrot.slane %v112, %v213
    %v216 = vunpack.c.l.s4 1966171168
    %v217 = vunpack.c.0.s8 %v216
    %v218 = vlaneseq
    %v219 = vshrl.u32 %v218, 7
    %v220 = vsub.s32 %v217, %v219
    %v221 = vrot.slane %v207, %v220
    %v222 = vcombine.high %v214, %v214
    %v223 = vcombine.high %v221, %v221
    %v225 = vunpack.c.l.s4 1966171168
    %v226 = vunpack.c.0.s8 %v225
    %v227 = vlaneseq
    %v228 = vshrl.u32 %v227, 7
    %v229 = vsub.s32 %v226, %v228
    %v230 = vrot.slane %v214, %v229
    %v232 = vunpack.c.l.s4 1966171168
    %v233 = vunpack.c.0.s8 %v232
    %v234 = vlaneseq
    %v235 = vshrl.u32 %v234, 7
    %v236 = vsub.s32 %v233, %v235
    %v237 = vrot.slane %v221, %v236
    %v239 = vunpack.c.l.s4 1966171168
    %v240 = vunpack.c.0.s8 %v239
    %v241 = vlaneseq
    %v242 = vshrl.u32 %v241, 7
    %v243 = vsub.s32 %v240, %v242
    %v244 = vrot.slane %v222, %v243
    %v246 = vunpack.c.l.s4 1966171168
    %v247 = vunpack.c.0.s8 %v246
    %v248 = vlaneseq
    %v249 = vshrl.u32 %v248, 7
    %v250 = vsub.s32 %v247, %v249
    %v251 = vrot.slane %v223, %v250
    %v252 = vcombine.high %v230, %v230
    %v253 = vcombine.high %v237, %v237
    %v254 = vcombine.high %v244, %v244
    %v255 = vcombine.high %v251, %v251
    %v258 = vcombine.high %v198, %v198
    %v260 = vunpack.c.l.s4 1983009808
    %v261 = vunpack.c.0.s8 %v260
    %v262 = vlaneseq
    %v263 = vshrl.u32 %v262, 7
    %v264 = vsub.s32 %v261, %v263
    %v265 = vrot.slane %v198, %v264
    %v267 = vunpack.c.l.s4 1983009808
    %v268 = vunpack.c.0.s8 %v267
    %v269 = vlaneseq
    %v270 = vshrl.u32 %v269, 7
    %v271 = vsub.s32 %v268, %v270
    %v272 = vrot.slane %v258, %v271
    %v273 = vcombine.high %v265, %v265
    %v274 = vcombine.high %v272, %v272
    %v276 = vunpack.c.l.s4 1983009808
    %v277 = vunpack.c.0.s8 %v276
    %v278 = vlaneseq
    %v279 = vshrl.u32 %v278, 7
    %v280 = vsub.s32 %v277, %v279
    %v281 = vrot.slane %v203, %v280
    %v282 = vcombine.high %v281, %v281
    %v283 = vlaneseq
    %v284 = vshrl.u32 %v283, 7
    %v285 = vsub.s32 0, %v284
    %v286 = vrot.slane %v230, %v285
    %v287 = vlaneseq
    %v288 = vshrl.u32 %v287, 7
    %v289 = vsub.s32 0, %v288
    %v290 = vrot.slane %v244, %v289
    %v291 = vlaneseq
    %v292 = vshrl.u32 %v291, 7
    %v293 = vsub.s32 0, %v292
    %v294 = vrot.slane %v252, %v293
    %v295 = vlaneseq
    %v296 = vshrl.u32 %v295, 7
    %v297 = vsub.s32 0, %v296
    %v298 = vrot.slane %v254, %v297
    %v299 = vlaneseq
    %v300 = vshrl.u32 %v299, 7
    %v301 = vsub.s32 0, %v300
    %v302 = vrot.slane %v237, %v301
    %v303 = vlaneseq
    %v304 = vshrl.u32 %v303, 7
    %v305 = vsub.s32 0, %v304
    %v306 = vrot.slane %v251, %v305
    %v307 = vlaneseq
    %v308 = vshrl.u32 %v307, 7
    %v309 = vsub.s32 0, %v308
    %v310 = vrot.slane %v253, %v309
    %v311 = vlaneseq
    %v312 = vshrl.u32 %v311, 7
    %v313 = vsub.s32 0, %v312
    %v314 = vrot.slane %v255, %v313
    %v323 = vcombine.low %v265, %v273
    %v325 = vunpack.c.l.s4 1983009808
    %v326 = vunpack.c.0.s8 %v325
    %v327 = vlaneseq
    %v328 = vshrl.u32 %v327, 7
    %v329 = vsub.s32 %v326, %v328
    %v330 = vrot.slane %v323, %v329
    %v332 = vunpack.c.l.s4 1983009808
    %v333 = vunpack.c.0.s8 %v332
    %v334 = vlaneseq
    %v335 = vshrl.u32 %v334, 7
    %v336 = vsub.s32 %v333, %v335
    %v337 = vrot.slane %v272, %v336
    %v338 = vcombine.low %v330, %v337
    %v339 = vcombine.low %v274, %v281
    %v341 = vunpack.c.l.s4 1983009808
    %v342 = vunpack.c.0.s8 %v341
    %v343 = vlaneseq
    %v344 = vshrl.u32 %v343, 7
    %v345 = vsub.s32 %v342, %v344
    %v346 = vrot.slane %v339, %v345
    %v348 = vunpack.c.l.s4 1983009808
    %v349 = vunpack.c.0.s8 %v348
    %v350 = vlaneseq
    %v351 = vshrl.u32 %v350, 7
    %v352 = vsub.s32 %v349, %v351
    %v353 = vrot.slane %v282, %v352
    %v354 = vcombine.low %v346, %v353
    %v357 = vmul.f32 %v286, %v338
    %v358 = vmul.f32 %v290, %v338
    %v359 = vmul.f32 %v294, %v338
    %v360 = vmul.f32 %v298, %v338
    %v361 = vmul.f32 %v302, %v354
    %v362 = vmul.f32 %v306, %v354
    %v363 = vmul.f32 %v310, %v354
    %v364 = vmul.f32 %v314, %v354
    %vm365 = vcmask 62464
    %v366 = vsel %vm365, %v357, -inf
    %v367 = vrot.slane %v366, 4
    %v368 = vmax.f32 %v366, %v367
    %v369 = vrot.slane %v368, 2
    %v370 = vmax.f32 %v368, %v369
    %v371 = vrot.slane %v370, 1
    %v372 = vmax.f32 %v370, %v371
    %v373 = vsel %vm365, %v358, -inf
    %v374 = vrot.slane %v373, 4
    %v375 = vmax.f32 %v373, %v374
    %v376 = vrot.slane %v375, 2
    %v377 = vmax.f32 %v375, %v376
    %v378 = vrot.slane %v377, 1
    %v379 = vmax.f32 %v377, %v378
    %v380 = vsel %vm365, %v359, -inf
    %v381 = vrot.slane %v380, 4
    %v382 = vmax.f32 %v380, %v381
    %v383 = vrot.slane %v382, 2
    %v384 = vmax.f32 %v382, %v383
    %v385 = vrot.slane %v384, 1
    %v386 = vmax.f32 %v384, %v385
    %v387 = vsel %vm365, %v360, -inf
    %v388 = vrot.slane %v387, 4
    %v389 = vmax.f32 %v387, %v388
    %v390 = vrot.slane %v389, 2
    %v391 = vmax.f32 %v389, %v390
    %v392 = vrot.slane %v391, 1
    %v393 = vmax.f32 %v391, %v392
    %v394 = vsel %vm365, %v361, -inf
    %v395 = vrot.slane %v394, 4
    %v396 = vmax.f32 %v394, %v395
    %v397 = vrot.slane %v396, 2
    %v398 = vmax.f32 %v396, %v397
    %v399 = vrot.slane %v398, 1
    %v400 = vmax.f32 %v398, %v399
    %v401 = vsel %vm365, %v362, -inf
    %v402 = vrot.slane %v401, 4
    %v403 = vmax.f32 %v401, %v402
    %v404 = vrot.slane %v403, 2
    %v405 = vmax.f32 %v403, %v404
    %v406 = vrot.slane %v405, 1
    %v407 = vmax.f32 %v405, %v406
    %v408 = vsel %vm365, %v363, -inf
    %v409 = vrot.slane %v408, 4
    %v410 = vmax.f32 %v408, %v409
    %v411 = vrot.slane %v410, 2
    %v412 = vmax.f32 %v410, %v411
    %v413 = vrot.slane %v412, 1
    %v414 = vmax.f32 %v412, %v413
    %v415 = vsel %vm365, %v364, -inf
    %v416 = vrot.slane %v415, 4
    %v417 = vmax.f32 %v415, %v416
    %v418 = vrot.slane %v417, 2
    %v419 = vmax.f32 %v417, %v418
    %v420 = vrot.slane %v419, 1
    %v421 = vmax.f32 %v419, %v420
    %v422 = vsub.f32 %v357, %v372
    %v423 = vsub.f32 %v358, %v379
    %v424 = vsub.f32 %v359, %v386
    %v425 = vsub.f32 %v360, %v393
    %v426 = vsub.f32 %v361, %v400
    %v427 = vsub.f32 %v362, %v407
    %v428 = vsub.f32 %v363, %v414
    %v429 = vsub.f32 %v364, %v421
    %v430 = vmul.f32 %v422, 1.442695
    %v431 = vpow.pop %v430
    %v432 = vmul.f32 %v423, 1.442695
    %v433 = vpow.pop %v432
    %v434 = vmul.f32 %v424, 1.442695
    %v435 = vpow.pop %v434
    %v436 = vmul.f32 %v425, 1.442695
    %v437 = vpow.pop %v436
    %v438 = vmul.f32 %v426, 1.442695
    %v439 = vpow.pop %v438
    %v440 = vmul.f32 %v427, 1.442695
    %v441 = vpow.pop %v440
    %v442 = vmul.f32 %v428, 1.442695
    %v443 = vpow.pop %v442
    %v444 = vmul.f32 %v429, 1.442695
    %v445 = vpow.pop %v444
    %v446 = vsel %vm365, %v431, 0.0
    %v447 = vrot.slane %v446, 4
    %v448 = vadd.f32 %v446, %v447
    %v449 = vrot.slane %v448, 2
    %v450 = vadd.f32 %v448, %v449
    %v451 = vrot.slane %v450, 1
    %v452 = vadd.f32 %v450, %v451
    %v453 = vsel %vm365, %v433, 0.0
    %v454 = vrot.slane %v453, 4
    %v455 = vadd.f32 %v453, %v454
    %v456 = vrot.slane %v455, 2
    %v457 = vadd.f32 %v455, %v456
    %v458 = vrot.slane %v457, 1
    %v459 = vadd.f32 %v457, %v458
    %v460 = vsel %vm365, %v435, 0.0
    %v461 = vrot.slane %v460, 4
    %v462 = vadd.f32 %v460, %v461
    %v463 = vrot.slane %v462, 2
    %v464 = vadd.f32 %v462, %v463
    %v465 = vrot.slane %v464, 1
    %v466 = vadd.f32 %v464, %v465
    %v467 = vsel %vm365, %v437, 0.0
    %v468 = vrot.slane %v467, 4
    %v469 = vadd.f32 %v467, %v468
    %v470 = vrot.slane %v469, 2
    %v471 = vadd.f32 %v469, %v470
    %v472 = vrot.slane %v471, 1
    %v473 = vadd.f32 %v471, %v472
    %v474 = vsel %vm365, %v439, 0.0
    %v475 = vrot.slane %v474, 4
    %v476 = vadd.f32 %v474, %v475
    %v477 = vrot.slane %v476, 2
    %v478 = vadd.f32 %v476, %v477
    %v479 = vrot.slane %v478, 1
    %v480 = vadd.f32 %v478, %v479
    %v481 = vsel %vm365, %v441, 0.0
    %v482 = vrot.slane %v481, 4
    %v483 = vadd.f32 %v481, %v482
    %v484 = vrot.slane %v483, 2
    %v485 = vadd.f32 %v483, %v484
    %v486 = vrot.slane %v485, 1
    %v487 = vadd.f32 %v485, %v486
    %v488 = vsel %vm365, %v443, 0.0
    %v489 = vrot.slane %v488, 4
    %v490 = vadd.f32 %v488, %v489
    %v491 = vrot.slane %v490, 2
    %v492 = vadd.f32 %v490, %v491
    %v493 = vrot.slane %v492, 1
    %v494 = vadd.f32 %v492, %v493
    %v495 = vsel %vm365, %v445, 0.0
    %v496 = vrot.slane %v495, 4
    %v497 = vadd.f32 %v495, %v496
    %v498 = vrot.slane %v497, 2
    %v499 = vadd.f32 %v497, %v498
    %v500 = vrot.slane %v499, 1
    %v501 = vadd.f32 %v499, %v500
    %v502 = vrcp.pop %v452
    %v503 = vrcp.pop %v459
    %v504 = vrcp.pop %v466
    %v505 = vrcp.pop %v473
    %v506 = vrcp.pop %v480
    %v507 = vrcp.pop %v487
    %v508 = vrcp.pop %v494
    %v509 = vrcp.pop %v501
    %v510 = vmul.f32 %v431, %v502
    %v511 = vmul.f32 %v433, %v503
    %v512 = vmul.f32 %v435, %v504
    %v513 = vmul.f32 %v437, %v505
    %v514 = vmul.f32 %v439, %v506
    %v515 = vmul.f32 %v441, %v507
    %v516 = vmul.f32 %v443, %v508
    %v517 = vmul.f32 %v445, %v509
    %518 = vrot.lane.b32.xlu0 %v338, 120
    %v519 = vpop.permute.xlu0 %518
    %520 = vrot.lane.b32.xlu0 %v354, 120
    %v521 = vpop.permute.xlu0 %520
    %v524 = vmul.f32 %v510, %v519
    %v525 = vmul.f32 %v511, %v519
    %v526 = vmul.f32 %v512, %v519
    %v527 = vmul.f32 %v513, %v519
    %v528 = vmul.f32 %v514, %v521
    %v529 = vmul.f32 %v515, %v521
    %v530 = vmul.f32 %v516, %v521
    %v531 = vmul.f32 %v517, %v521
    %v532 = vsel %vm365, %v524, 0.0
    %v533 = vrot.slane %v532, 4
    %v534 = vadd.f32 %v532, %v533
    %v535 = vrot.slane %v534, 2
    %v536 = vadd.f32 %v534, %v535
    %v537 = vrot.slane %v536, 1
    %v538 = vadd.f32 %v536, %v537
    %v539 = vsel %vm365, %v525, 0.0
    %v540 = vrot.slane %v539, 4
    %v541 = vadd.f32 %v539, %v540
    %v542 = vrot.slane %v541, 2
    %v543 = vadd.f32 %v541, %v542
    %v544 = vrot.slane %v543, 1
    %v545 = vadd.f32 %v543, %v544
    %v546 = vsel %vm365, %v526, 0.0
    %v547 = vrot.slane %v546, 4
    %v548 = vadd.f32 %v546, %v547
    %v549 = vrot.slane %v548, 2
    %v550 = vadd.f32 %v548, %v549
    %v551 = vrot.slane %v550, 1
    %v552 = vadd.f32 %v550, %v551
    %v553 = vsel %vm365, %v527, 0.0
    %v554 = vrot.slane %v553, 4
    %v555 = vadd.f32 %v553, %v554
    %v556 = vrot.slane %v555, 2
    %v557 = vadd.f32 %v555, %v556
    %v558 = vrot.slane %v557, 1
    %v559 = vadd.f32 %v557, %v558
    %v560 = vsel %vm365, %v528, 0.0
    %v561 = vrot.slane %v560, 4
    %v562 = vadd.f32 %v560, %v561
    %v563 = vrot.slane %v562, 2
    %v564 = vadd.f32 %v562, %v563
    %v565 = vrot.slane %v564, 1
    %v566 = vadd.f32 %v564, %v565
    %v567 = vsel %vm365, %v529, 0.0
    %v568 = vrot.slane %v567, 4
    %v569 = vadd.f32 %v567, %v568
    %v570 = vrot.slane %v569, 2
    %v571 = vadd.f32 %v569, %v570
    %v572 = vrot.slane %v571, 1
    %v573 = vadd.f32 %v571, %v572
    %v574 = vsel %vm365, %v530, 0.0
    %v575 = vrot.slane %v574, 4
    %v576 = vadd.f32 %v574, %v575
    %v577 = vrot.slane %v576, 2
    %v578 = vadd.f32 %v576, %v577
    %v579 = vrot.slane %v578, 1
    %v580 = vadd.f32 %v578, %v579
    %v581 = vsel %vm365, %v531, 0.0
    %v582 = vrot.slane %v581, 4
    %v583 = vadd.f32 %v581, %v582
    %v584 = vrot.slane %v583, 2
    %v585 = vadd.f32 %v583, %v584
    %v586 = vrot.slane %v585, 1
    %v587 = vadd.f32 %v585, %v586
    %v588 = vld [vmem:[%s6] sm:$0xff]
    %v589 = vld [vmem:[%s7] sm:$0x1]
    %v591 = vlaneseq
    %v592 = vshrl.u32 %v591, 7
    %v593 = vsub.s32 0, %v592
    %v594 = vrot.slane %v589, %v593
    %vm604 = vcmask 1041409
    %v605 = vsel %vm604, %v545, %v538
    %vm606 = vcmask 1042434
    %v607 = vsel %vm606, %v552, %v605
    %vm608 = vcmask 1043459
    %v609 = vsel %vm608, %v559, %v607
    %vm610 = vcmask 1044484
    %v611 = vsel %vm610, %v566, %v609
    %vm612 = vcmask 1045509
    %v613 = vsel %vm612, %v573, %v611
    %vm614 = vcmask 1046534
    %v615 = vsel %vm614, %v580, %v613
    %vm616 = vcmask 1047559
    %v617 = vsel %vm616, %v587, %v615
    %v618 = vsel %vm41, %v617, 0
    %620 = vmatprep.subr.mxu0 0.0
    %621 = vmatpush1.msra.mxu0 %v588
    %622 = vmatprep.subr.mxu0 0.0
    %623 = vmatpush1.msra.mxu0 0.0
    %624 = vmatprep.subr.mxu0 0.0
    %625 = vmatpush1.msra.mxu0 0.0
    %626 = vmatprep.subr.mxu0 0.0
    %627 = vmatpush1.msra.mxu0 0.0
    %628 = vmatprep.subr.mxu0 0.0
    %629 = vmatpush1.msra.mxu0 0.0
    %630 = vmatprep.subr.mxu0 0.0
    %631 = vmatpush1.msra.mxu0 0.0
    %632 = vmatprep.subr.mxu0 0.0
    %633 = vmatpush1.msra.mxu0 0.0
    %634 = vmatprep.subr.mxu0 0.0
    %635 = vmatpush1.msra.mxu0 0.0
    %636 = vmatprep.subr.mxu0 0.0
    %637 = vmatpush1.msra.mxu0 0.0
    %638 = vmatprep.subr.mxu0 0.0
    %639 = vmatpush1.msra.mxu0 0.0
    %640 = vmatprep.subr.mxu0 0.0
    %641 = vmatpush1.msra.mxu0 0.0
    %642 = vmatprep.subr.mxu0 0.0
    %643 = vmatpush1.msra.mxu0 0.0
    %644 = vmatprep.subr.mxu0 0.0
    %645 = vmatpush1.msra.mxu0 0.0
    %646 = vmatprep.subr.mxu0 0.0
    %647 = vmatpush1.msra.mxu0 0.0
    %648 = vmatprep.subr.mxu0 0.0
    %649 = vmatpush1.msra.mxu0 0.0
    %650 = vmatprep.subr.mxu0 0.0
    %651 = vmatpush1.msra.mxu0 0.0
    %652 = vmatprep.subr.mxu0 0.0
    %653 = vmatpush1.msra.mxu0 0.0
    %654 = vmatprep.subr.mxu0 0.0
    %655 = vmatpush1.msra.mxu0 0.0
    %656 = vmatprep.subr.mxu0 0.0
    %657 = vmatpush1.msra.mxu0 0.0
    %658 = vmatprep.subr.mxu0 0.0
    %659 = vmatpush1.msra.mxu0 0.0
    %660 = vmatprep.subr.mxu0 0.0
    %661 = vmatpush1.msra.mxu0 0.0
    %662 = vmatprep.subr.mxu0 0.0
    %663 = vmatpush1.msra.mxu0 0.0
    %664 = vmatprep.subr.mxu0 0.0
    %665 = vmatpush1.msra.mxu0 0.0
    %666 = vmatprep.subr.mxu0 0.0
    %667 = vmatpush1.msra.mxu0 0.0
    %668 = vmatprep.subr.mxu0 0.0
    %669 = vmatpush1.msra.mxu0 0.0
    %670 = vmatprep.subr.mxu0 0.0
    %671 = vmatpush1.msra.mxu0 0.0
    %672 = vmatprep.subr.mxu0 0.0
    %673 = vmatpush1.msra.mxu0 0.0
    %674 = vmatprep.subr.mxu0 0.0
    %675 = vmatpush1.msra.mxu0 0.0
    %676 = vmatprep.subr.mxu0 0.0
    %677 = vmatpush1.msra.mxu0 0.0
    %678 = vmatprep.subr.mxu0 0.0
    %679 = vmatpush1.msra.mxu0 0.0
    %680 = vmatprep.subr.mxu0 0.0
    %681 = vmatpush1.msra.mxu0 0.0
    %682 = vmatprep.subr.mxu0 0.0
    %683 = vmatpush1.msra.mxu0 0.0
    %684 = vmatprep.mubr.f32.mxu0 0.0
    %685 = vmatmul.mubr.f32.gmra.mrb[0].mxu0 %v618
    %v686 = vpop.f32.mrb[0].mxu0
    %v687 = vadd.f32 %v594, %v686
    %v688 = vpop.f32.mrb[0].mxu0
    %689 = vdwg.mxu0
    %690 = vst.msk [vmem:[%s8] sm:$0xff] %vm41, %v687
    %v691 = vsel %vm365, %v510, 0.0
    %692 = vadd.xlane.f32.xlu0 %v691
    %v693 = vpop.xlane.xlu0 %692
    %v694 = vsel %vm365, %v511, 0.0
    %695 = vadd.xlane.f32.xlu0 %v694
    %v696 = vpop.xlane.xlu0 %695
    %v697 = vsel %vm365, %v512, 0.0
    %698 = vadd.xlane.f32.xlu0 %v697
    %v699 = vpop.xlane.xlu0 %698
    %v700 = vsel %vm365, %v513, 0.0
    %701 = vadd.xlane.f32.xlu0 %v700
    %v702 = vpop.xlane.xlu0 %701
    %v703 = vsel %vm365, %v514, 0.0
    %704 = vadd.xlane.f32.xlu0 %v703
    %v705 = vpop.xlane.xlu0 %704
    %v706 = vsel %vm365, %v515, 0.0
    %707 = vadd.xlane.f32.xlu0 %v706
    %v708 = vpop.xlane.xlu0 %707
    %v709 = vsel %vm365, %v516, 0.0
    %710 = vadd.xlane.f32.xlu0 %v709
    %v711 = vpop.xlane.xlu0 %710
    %v712 = vsel %vm365, %v517, 0.0
    %713 = vadd.xlane.f32.xlu0 %v712
    %v714 = vpop.xlane.xlu0 %713
    %v715 = vrcp.pop 8.0
    %v716 = vmul.f32 %v693, %v715
    %v717 = vmul.f32 %v696, %v715
    %v718 = vmul.f32 %v699, %v715
    %v719 = vmul.f32 %v702, %v715
    %v720 = vmul.f32 %v705, %v715
    %v721 = vmul.f32 %v708, %v715
    %v722 = vmul.f32 %v711, %v715
    %v723 = vmul.f32 %v714, %v715
    %v732 = vlaneseq
    %v733 = vand.u32 %v732, 127
    %v734 = vlaneseq
    %v735 = vshrl.u32 %v734, 7
    %v736 = vsub.s32 %v733, %v735
    %v737 = vrot.slane %v716, %v736
    %v738 = vlaneseq
    %v739 = vshrl.u32 %v738, 7
    %v740 = vsub.s32 %v733, %v739
    %v741 = vrot.slane %v717, %v740
    %v742 = vlaneseq
    %v743 = vshrl.u32 %v742, 7
    %v744 = vsub.s32 %v733, %v743
    %v745 = vrot.slane %v718, %v744
    %v746 = vlaneseq
    %v747 = vshrl.u32 %v746, 7
    %v748 = vsub.s32 %v733, %v747
    %v749 = vrot.slane %v719, %v748
    %v750 = vlaneseq
    %v751 = vshrl.u32 %v750, 7
    %v752 = vsub.s32 %v733, %v751
    %v753 = vrot.slane %v720, %v752
    %v754 = vlaneseq
    %v755 = vshrl.u32 %v754, 7
    %v756 = vsub.s32 %v733, %v755
    %v757 = vrot.slane %v721, %v756
    %v758 = vlaneseq
    %v759 = vshrl.u32 %v758, 7
    %v760 = vsub.s32 %v733, %v759
    %v761 = vrot.slane %v722, %v760
    %v762 = vlaneseq
    %v763 = vshrl.u32 %v762, 7
    %v764 = vsub.s32 %v733, %v763
    %v765 = vrot.slane %v723, %v764
    %v766 = vsel %vm604, %v741, %v737
    %v767 = vsel %vm606, %v745, %v766
    %v768 = vsel %vm608, %v749, %v767
    %v769 = vsel %vm604, %v757, %v753
    %v770 = vsel %vm606, %v761, %v769
    %v771 = vsel %vm608, %v765, %v770
    %vm774 = vcmask 44032
    %775 = vst.msk [vmem:[#allocation2] sm:$0xf] %vm774, %v768
    %776 = vst.msk [vmem:[#allocation2 + $0x4] sm:$0xf] %vm774, %v771
    // Predicated region
    $region34: #{multihead_attention.1} parent=1 // pred_check
      _
    $region35: #{multihead_attention.1} parent=1 // pred_check_branch
      %778 = sbr.rel (0) target = $region37
    $region36: #{multihead_attention.1} parent=1 // pred_region
      _
    $region37: #{multihead_attention.1} parent=1 // pred_fallthru
      _
    // Predicated region
    $region38: #{multihead_attention.1} parent=1 // pred_check
      _
    $region39: #{multihead_attention.1} parent=1 // pred_check_branch
      %780 = sbr.rel (0) target = $region41
    $region40: #{multihead_attention.1} parent=1 // pred_region
      %s782 = ssub.s32 128, 128
      %783 = vsyncadd [#allocation3], %s782
      %s784 = sshll.u32 [#allocation2], 4
      %s785 = int_to_ptr.vmem [resolvable:$true] %s784
      %790 = dma.vmem_to_hbm [thread:$0]  %s785, 128, %s9, [#allocation3], 64, 64, 4
    $region41: #{multihead_attention.1} parent=1 // pred_fallthru
      _
    // Predicated region
    $region42: #{multihead_attention.1} parent=1 // pred_check
      _
    $region43: #{multihead_attention.1} parent=1 // pred_check_branch
      %792 = sbr.rel (0) target = $region45
    $region44: #{multihead_attention.1} parent=1 // pred_region
      _
    $region45: #{multihead_attention.1} parent=1 // pred_fallthru
      _
    // Predicated region
    $region46: #{multihead_attention.1} parent=1 // pred_check
      _
    $region47: #{multihead_attention.1} parent=1 // pred_check_branch
      %794 = sbr.rel (0) target = $region49
    $region48: #{multihead_attention.1} parent=1 // pred_region
      %795 = dma.done [#allocation3], 128
    $region49: #{multihead_attention.1} parent=1 // pred_fallthru
      _
    %796 = vsyncpa [#allocation3], 1

</llo_original>
